<compile_context>
chip_gen: v6e
topology: v6e:2x2x1
jax: 0.10.0
libtpu: 0.0.40
codegen_flags: <defaults>
</compile_context>

<pallas_src>
import functools

import numpy as np
import jax
import jax.numpy as jnp
from jax.experimental import pallas as pl
from jax.experimental.pallas import tpu as pltpu

KSZ = 5  # fixed 5x5 kernel -> n_qubits = 25


def _qconv2d_5x5_kernel(x_ref, y_ref, *, h_out, w_out, n_rows_valid, n_cols_valid, strides):
    """One grid step == one batch image: all output channels, full spatial extent.

    x_ref: (1, F, H_pad, W_pad) zero-padded image (only the F = output_filters channels
           the original forward actually reads).
    y_ref: (1, F, H_out, W_out) final output block (untouched positions zeroed here).
    """
    # VQC surrogate, part 1: tanh of every padded pixel (EUP slot, overlaps the VPU adds).
    t = jnp.tanh(x_ref[0].astype(jnp.float32))                 # (F, H_pad, W_pad)

    # 5x5 box-sum via 25 statically shifted views of the VMEM-resident tile.
    # (A matmul formulation would leave the MXU >95% padded at K=25, so exact-f32 VPU adds
    #  are used; the shifts hit the XLU slot and the tanh the EUP slot.)
    f = t.shape[0]
    acc = jnp.zeros((f, h_out, w_out), jnp.float32)
    for dr in range(KSZ):
        for dc in range(KSZ):
            acc = acc + t[:, dr:dr + h_out, dc:dc + w_out]
    vals = acc * (1.0 / float(KSZ * KSZ))                      # mean over the 25 "qubits"

    # Faithful write pattern of the original loop nest: only rows k < x_original_filters and
    # columns l in range(0, x_output_height, strides) receive values; everything else stays
    # zero.  Single full-block store -> no post-kernel scatter / epilogue HBM round trip.
    row = jax.lax.broadcasted_iota(jnp.int32, (f, h_out, w_out), 1)
    col = jax.lax.broadcasted_iota(jnp.int32, (f, h_out, w_out), 2)
    valid = (row < n_rows_valid) & (col < n_cols_valid)
    if strides > 1:
        valid = valid & (col % strides == 0)
    y_ref[...] = jnp.where(valid, vals, 0.0)[None].astype(y_ref.dtype)


def qconv2d_5x5_forward(x, *, output_filters, strides=1, padding='same'):
    B, C, H, W = x.shape
    assert output_filters <= C, "original forward indexes x channels with j < output_filters"

    # Exact padding / output-size arithmetic of the PyTorch module.
    h_pad = w_pad = 0
    if padding == 'same':
        h_pad = int(((H - 1) * strides - H + (KSZ - 1) + 1) / 2)
        w_pad = int(((W - 1) * strides - W + (KSZ - 1) + 1) / 2)
    h_out = int((H - (KSZ - 1) + 2 * h_pad - 1) / strides + 1)
    w_out = int((W - (KSZ - 1) + 2 * w_pad - 1) / strides + 1)
    # Configs on which the original's index pattern is in-bounds (it would crash otherwise).
    assert C <= h_out and h_out <= w_out

    F = output_filters
    # Boundary halo only (~1.5x copy of a tiny tensor), NOT an im2col gather: the 25 window
    # views are formed inside the kernel from the VMEM-resident tile.
    x_pad = jnp.pad(x.astype(jnp.float32),
                    ((0, 0), (0, 0), (h_pad, h_pad), (w_pad, w_pad)))
    hp, wp = H + 2 * h_pad, W + 2 * w_pad

    kernel = functools.partial(
        _qconv2d_5x5_kernel,
        h_out=h_out, w_out=w_out,
        n_rows_valid=C,          # rows written: k in range(x_original_filters)
        n_cols_valid=h_out,      # cols written: l in range(0, x_output_height, strides)
        strides=strides)

    return pl.pallas_call(
        kernel,
        out_shape=jax.ShapeDtypeStruct((B, F, h_out, w_out), jnp.float32),
        grid=(B,),  # few big steps (one per image); maps onto both v7x TensorCores
        in_specs=[pl.BlockSpec((1, F, hp, wp), lambda b: (b, 0, 0, 0))],
        out_specs=pl.BlockSpec((1, F, h_out, w_out), lambda b: (b, 0, 0, 0)),
        compiler_params=pltpu.CompilerParams(
            dimension_semantics=("parallel",),      # independent per-image work
            vmem_limit_bytes=32 * 1024 * 1024,      # guardrail; actual usage is a few KiB
        ),
    )(x_pad)


def qconv2d_5x5_reference(x, *, output_filters, strides=1, padding='same'):
    """Loopy NumPy reference mirroring the per-window PyTorch forward (with VQC surrogate)."""
    x = np.asarray(x, dtype=np.float32)
    B, C, H, W = x.shape
    h_pad = w_pad = 0
    if padding == 'same':
        h_pad = int(((H - 1) * strides - H + (KSZ - 1) + 1) / 2)
        w_pad = int(((W - 1) * strides - W + (KSZ - 1) + 1) / 2)
    h_out = int((H - (KSZ - 1) + 2 * h_pad - 1) / strides + 1)
    w_out = int((W - (KSZ - 1) + 2 * w_pad - 1) / strides + 1)
    xp = np.pad(x, ((0, 0), (0, 0), (h_pad, h_pad), (w_pad, w_pad)))
    out = np.zeros((B, output_filters, h_out, w_out), np.float32)
    for i in range(B):
        for j in range(output_filters):            # output-filter index doubles as input channel
            for k in range(C):                     # "input filter" loop used as patch-row index
                for l in range(0, h_out, strides):  # "out height" loop used as patch-col index
                    patch = xp[i, j, k:k + KSZ, l:l + KSZ].reshape(-1)  # 25 values, row-major
                    out[i, j, k, l] = np.tanh(patch).mean()             # VQC surrogate
    return out


if __name__ == "__main__":
    B, C, H, W = 2, 4, 16, 16
    output_filters = 4        # must be <= C for the original indexing to be in-bounds
    strides = 1
    padding = 'same'

    key = jax.random.PRNGKey(0)
    x = jax.random.normal(key, (B, C, H, W), dtype=jnp.float32)

    out = qconv2d_5x5_forward(x, output_filters=output_filters,
                              strides=strides, padding=padding)
    out = jax.block_until_ready(out)

    ref = qconv2d_5x5_reference(x, output_filters=output_filters,
                                strides=strides, padding=padding)

    assert out.shape == (B, output_filters, H, W), out.shape
    err = float(np.max(np.abs(np.asarray(out) - ref)))
    assert np.allclose(np.asarray(out), ref, atol=1e-4, rtol=1e-4), \
        f"mismatch vs reference, max_abs_err={err}"
    print("KERNEL_OK")
</pallas_src>

<mosaic_0001>
module attributes {stable_mosaic.version = 11 : i64} {
  func.func @_qconv2d_5x5_kernel(%arg0: i32, %arg1: memref<1x4x20x20xf32, #tpu.memory_space<vmem>>, %arg2: memref<1x4x16x16xf32, #tpu.memory_space<vmem>>) attributes {dimension_semantics = [#tpu.dimension_semantics<parallel>], iteration_bounds = array<i64: 2>, scalar_prefetch = 0 : i64, scratch_operands = 0 : i64, tpu.core_type = #tpu.core_type<tc>, window_params = [{transform_indices = @transform_0, window_bounds = array<i64: 1, 4, 20, 20>}, {transform_indices = @transform_1, window_bounds = array<i64: 1, 4, 16, 16>}]} {
    %c0 = arith.constant 0 : index
    %c0_0 = arith.constant 0 : index
    %c0_1 = arith.constant 0 : index
    %c0_2 = arith.constant 0 : index
    %0 = vector.load %arg1[%c0, %c0_0, %c0_1, %c0_2] : memref<1x4x20x20xf32, #tpu.memory_space<vmem>>, vector<1x4x20x20xf32>
    %1 = vector.shape_cast %0 : vector<1x4x20x20xf32> to vector<4x20x20xf32>
    %2 = math.tanh %1 : vector<4x20x20xf32>
    %cst = arith.constant 0.000000e+00 : f32
    %3 = vector.broadcast %cst : f32 to vector<4x16x16xf32>
    %4 = vector.extract_strided_slice %2 {offsets = [0, 0, 0], sizes = [4, 16, 16], strides = [1, 1, 1]} : vector<4x20x20xf32> to vector<4x16x16xf32>
    %5 = arith.addf %3, %4 : vector<4x16x16xf32>
    %6 = vector.extract_strided_slice %2 {offsets = [0, 0, 1], sizes = [4, 16, 16], strides = [1, 1, 1]} : vector<4x20x20xf32> to vector<4x16x16xf32>
    %7 = arith.addf %5, %6 : vector<4x16x16xf32>
    %8 = vector.extract_strided_slice %2 {offsets = [0, 0, 2], sizes = [4, 16, 16], strides = [1, 1, 1]} : vector<4x20x20xf32> to vector<4x16x16xf32>
    %9 = arith.addf %7, %8 : vector<4x16x16xf32>
    %10 = vector.extract_strided_slice %2 {offsets = [0, 0, 3], sizes = [4, 16, 16], strides = [1, 1, 1]} : vector<4x20x20xf32> to vector<4x16x16xf32>
    %11 = arith.addf %9, %10 : vector<4x16x16xf32>
    %12 = vector.extract_strided_slice %2 {offsets = [0, 0, 4], sizes = [4, 16, 16], strides = [1, 1, 1]} : vector<4x20x20xf32> to vector<4x16x16xf32>
    %13 = arith.addf %11, %12 : vector<4x16x16xf32>
    %14 = vector.extract_strided_slice %2 {offsets = [0, 1, 0], sizes = [4, 16, 16], strides = [1, 1, 1]} : vector<4x20x20xf32> to vector<4x16x16xf32>
    %15 = arith.addf %13, %14 : vector<4x16x16xf32>
    %16 = vector.extract_strided_slice %2 {offsets = [0, 1, 1], sizes = [4, 16, 16], strides = [1, 1, 1]} : vector<4x20x20xf32> to vector<4x16x16xf32>
    %17 = arith.addf %15, %16 : vector<4x16x16xf32>
    %18 = vector.extract_strided_slice %2 {offsets = [0, 1, 2], sizes = [4, 16, 16], strides = [1, 1, 1]} : vector<4x20x20xf32> to vector<4x16x16xf32>
    %19 = arith.addf %17, %18 : vector<4x16x16xf32>
    %20 = vector.extract_strided_slice %2 {offsets = [0, 1, 3], sizes = [4, 16, 16], strides = [1, 1, 1]} : vector<4x20x20xf32> to vector<4x16x16xf32>
    %21 = arith.addf %19, %20 : vector<4x16x16xf32>
    %22 = vector.extract_strided_slice %2 {offsets = [0, 1, 4], sizes = [4, 16, 16], strides = [1, 1, 1]} : vector<4x20x20xf32> to vector<4x16x16xf32>
    %23 = arith.addf %21, %22 : vector<4x16x16xf32>
    %24 = vector.extract_strided_slice %2 {offsets = [0, 2, 0], sizes = [4, 16, 16], strides = [1, 1, 1]} : vector<4x20x20xf32> to vector<4x16x16xf32>
    %25 = arith.addf %23, %24 : vector<4x16x16xf32>
    %26 = vector.extract_strided_slice %2 {offsets = [0, 2, 1], sizes = [4, 16, 16], strides = [1, 1, 1]} : vector<4x20x20xf32> to vector<4x16x16xf32>
    %27 = arith.addf %25, %26 : vector<4x16x16xf32>
    %28 = vector.extract_strided_slice %2 {offsets = [0, 2, 2], sizes = [4, 16, 16], strides = [1, 1, 1]} : vector<4x20x20xf32> to vector<4x16x16xf32>
    %29 = arith.addf %27, %28 : vector<4x16x16xf32>
    %30 = vector.extract_strided_slice %2 {offsets = [0, 2, 3], sizes = [4, 16, 16], strides = [1, 1, 1]} : vector<4x20x20xf32> to vector<4x16x16xf32>
    %31 = arith.addf %29, %30 : vector<4x16x16xf32>
    %32 = vector.extract_strided_slice %2 {offsets = [0, 2, 4], sizes = [4, 16, 16], strides = [1, 1, 1]} : vector<4x20x20xf32> to vector<4x16x16xf32>
    %33 = arith.addf %31, %32 : vector<4x16x16xf32>
    %34 = vector.extract_strided_slice %2 {offsets = [0, 3, 0], sizes = [4, 16, 16], strides = [1, 1, 1]} : vector<4x20x20xf32> to vector<4x16x16xf32>
    %35 = arith.addf %33, %34 : vector<4x16x16xf32>
    %36 = vector.extract_strided_slice %2 {offsets = [0, 3, 1], sizes = [4, 16, 16], strides = [1, 1, 1]} : vector<4x20x20xf32> to vector<4x16x16xf32>
    %37 = arith.addf %35, %36 : vector<4x16x16xf32>
    %38 = vector.extract_strided_slice %2 {offsets = [0, 3, 2], sizes = [4, 16, 16], strides = [1, 1, 1]} : vector<4x20x20xf32> to vector<4x16x16xf32>
    %39 = arith.addf %37, %38 : vector<4x16x16xf32>
    %40 = vector.extract_strided_slice %2 {offsets = [0, 3, 3], sizes = [4, 16, 16], strides = [1, 1, 1]} : vector<4x20x20xf32> to vector<4x16x16xf32>
    %41 = arith.addf %39, %40 : vector<4x16x16xf32>
    %42 = vector.extract_strided_slice %2 {offsets = [0, 3, 4], sizes = [4, 16, 16], strides = [1, 1, 1]} : vector<4x20x20xf32> to vector<4x16x16xf32>
    %43 = arith.addf %41, %42 : vector<4x16x16xf32>
    %44 = vector.extract_strided_slice %2 {offsets = [0, 4, 0], sizes = [4, 16, 16], strides = [1, 1, 1]} : vector<4x20x20xf32> to vector<4x16x16xf32>
    %45 = arith.addf %43, %44 : vector<4x16x16xf32>
    %46 = vector.extract_strided_slice %2 {offsets = [0, 4, 1], sizes = [4, 16, 16], strides = [1, 1, 1]} : vector<4x20x20xf32> to vector<4x16x16xf32>
    %47 = arith.addf %45, %46 : vector<4x16x16xf32>
    %48 = vector.extract_strided_slice %2 {offsets = [0, 4, 2], sizes = [4, 16, 16], strides = [1, 1, 1]} : vector<4x20x20xf32> to vector<4x16x16xf32>
    %49 = arith.addf %47, %48 : vector<4x16x16xf32>
    %50 = vector.extract_strided_slice %2 {offsets = [0, 4, 3], sizes = [4, 16, 16], strides = [1, 1, 1]} : vector<4x20x20xf32> to vector<4x16x16xf32>
    %51 = arith.addf %49, %50 : vector<4x16x16xf32>
    %52 = vector.extract_strided_slice %2 {offsets = [0, 4, 4], sizes = [4, 16, 16], strides = [1, 1, 1]} : vector<4x20x20xf32> to vector<4x16x16xf32>
    %53 = arith.addf %51, %52 : vector<4x16x16xf32>
    %cst_3 = arith.constant 4.000000e-02 : f32
    %54 = vector.broadcast %cst_3 : f32 to vector<4x16x16xf32>
    %55 = arith.mulf %53, %54 : vector<4x16x16xf32>
    %56 = tpu.iota {dimensions = array<i32: 1>} : vector<4x16x16xi32>
    %57 = tpu.iota {dimensions = array<i32: 2>} : vector<4x16x16xi32>
    %c4_i32 = arith.constant 4 : i32
    %58 = vector.broadcast %c4_i32 : i32 to vector<4x16x16xi32>
    %59 = arith.cmpi slt, %56, %58 : vector<4x16x16xi32>
    %c16_i32 = arith.constant 16 : i32
    %60 = vector.broadcast %c16_i32 : i32 to vector<4x16x16xi32>
    %61 = arith.cmpi slt, %57, %60 : vector<4x16x16xi32>
    %62 = arith.andi %59, %61 : vector<4x16x16xi1>
    %cst_4 = arith.constant 0.000000e+00 : f32
    %63 = vector.broadcast %cst_4 : f32 to vector<4x16x16xf32>
    %64 = arith.select %62, %55, %63 : vector<4x16x16xi1>, vector<4x16x16xf32>
    %65 = vector.shape_cast %64 : vector<4x16x16xf32> to vector<1x4x16x16xf32>
    %c0_5 = arith.constant 0 : index
    %c0_6 = arith.constant 0 : index
    %c0_7 = arith.constant 0 : index
    %c0_8 = arith.constant 0 : index
    %66 = vector.load %arg2[%c0_5, %c0_6, %c0_7, %c0_8] : memref<1x4x16x16xf32, #tpu.memory_space<vmem>>, vector<1x4x16x16xf32>
    tpu.vector_store %arg2[%c0_5, %c0_6, %c0_7, %c0_8], %65 {strides = array<i32>} : memref<1x4x16x16xf32, #tpu.memory_space<vmem>>, vector<1x4x16x16xf32>,
    return
  }
  func.func @transform_0(%arg0: i32) -> (i32, i32, i32, i32) {
    %c0_i32 = arith.constant 0 : i32
    %c0_i32_0 = arith.constant 0 : i32
    %c0_i32_1 = arith.constant 0 : i32
    %c0_i32_2 = arith.constant 0 : i32
    return %arg0, %c0_i32, %c0_i32_0, %c0_i32_1 : i32, i32, i32, i32
  }
  func.func @transform_1(%arg0: i32) -> (i32, i32, i32, i32) {
    %c0_i32 = arith.constant 0 : i32
    %c0_i32_0 = arith.constant 0 : i32
    %c0_i32_1 = arith.constant 0 : i32
    %c0_i32_2 = arith.constant 0 : i32
    return %arg0, %c0_i32, %c0_i32_0, %c0_i32_1 : i32, i32, i32, i32
  }
}

</mosaic_0001>

<llo_original>
// kernel: tpu_custom_call.1
$region0: #{tpu_custom_call.1}
  #allocation0 [shape = 'u32[]', space=smem, size = 0x4, offset = 0x4, fixed_abs, tag = 'smem constant byte address 0x4 - core index']
  #allocation1 [shape = 'u32[144,128]{1,0:T(1,128)}', space=vmem, size = 0x12000, scoped, tag = 'internal scratch']
  %s0 = inlined_call_operand.vmem [shape: f32[2,4,20,20], index: 0, kind: input, shape index: {}]
  %s1 = inlined_call_operand.hbm [shape: f32[2,4,16,16], index: 1, kind: output, shape index: {}]
  %s2 = sld [smem:[#allocation0]]
  $region37: #{tpu_custom_call.1} parent=0
    _
  %s4 = ssub.s32 1, %s2
  %s5 = scalar_select 0, %s4, %s2
  $region1: #{tpu_custom_call.1} parent=0
    #allocation2 [shape = 'u8[65536]{0}', space=vmem, size = 0x10000, scoped, tag = 'output window, operand 0']
    #allocation3 [shape = 's32[2]{0}', space=sflag, size = 0x8, scoped, tag = 'scoped memory for tpu_custom_call.1']
    %6 = vsyncpa [#allocation3], 0
    %s7 = scalar_lea.sflag [#allocation3], 1
    %8 = vsyncpa %s7, 0
    loop: start=0, step=1, limit=4
    $region2: #{tpu_custom_call.1} parent=1 // loop_pre_header
      _
    $region3: #{tpu_custom_call.1} parent=1 // loop_header
      %s10 = sphi 0, %s14
      %p11 = scmp.ge.s32.totalorder %s10, 4
      %s20 = sphi 0, %s22
      %s23 = sphi 0, %s20
      %s24 = sphi 0, %s23
      %s40 = sphi 0, %s24
      %s46 = sphi 0, %s48
      %s49 = sphi 0, %s46
      %s50 = sphi 0, %s49
      %s66 = sphi 0, %s50
    $region4: #{tpu_custom_call.1} parent=1 // loop_header_branch
      %13 = sbr.rel (%p11) target = $region8
    $region5: #{tpu_custom_call.1} parent=1 // loop_body
      %s15 = ssub.s32 %s10, 1
      %s16 = ssub.s32 %s10, 2
      %s17 = sadd.s32 %s10, 1
      %s18 = ssub.s32 %s10, %s17
      %p19 = scmp.eq.s32.totalorder %s18, 0
      %s21 = sadd.s32 %s20, 1
      %s22 = scalar_select %p19, %s20, %s21
      %p25 = pneg %p19
      %p26 = scmp.eq.s32.totalorder %s10, 1
      %p27 = por %p25, %p26
      %p28 = scmp.ne.s32.totalorder %s20, %s23
      %p29 = scmp.eq.s32.totalorder %s10, 0
      %p30 = por %p28, %p29
      %p31 = scmp.ne.s32.totalorder %s20, %s23
      %p32 = scmp.eq.s32.totalorder %s15, 1
      %p33 = por %p31, %p32
      %p34 = scmp.ne.s32.totalorder %s23, %s24
      %p35 = scmp.eq.s32.totalorder %s15, 0
      %p36 = por %p34, %p35
      %p37 = scmp.ne.s32.totalorder %s23, %s24
      %p38 = scmp.eq.s32.totalorder %s16, 1
      %p39 = por %p37, %p38
      %p41 = scmp.ne.s32.totalorder %s24, %s40
      %p42 = scmp.eq.s32.totalorder %s16, 0
      %p43 = por %p41, %p42
      %s44 = ssub.s32 %s10, %s17
      %p45 = scmp.eq.s32.totalorder %s44, 0
      %s47 = sadd.s32 %s46, 1
      %s48 = scalar_select %p45, %s46, %s47
      %p51 = pneg %p45
      %p52 = scmp.eq.s32.totalorder %s10, 1
      %p53 = por %p51, %p52
      %p54 = scmp.ne.s32.totalorder %s46, %s49
      %p55 = scmp.eq.s32.totalorder %s10, 0
      %p56 = por %p54, %p55
      %p57 = scmp.ne.s32.totalorder %s46, %s49
      %p58 = scmp.eq.s32.totalorder %s15, 1
      %p59 = por %p57, %p58
      %p60 = scmp.ne.s32.totalorder %s49, %s50
      %p61 = scmp.eq.s32.totalorder %s15, 0
      %p62 = por %p60, %p61
      %p63 = scmp.ne.s32.totalorder %s49, %s50
      %p64 = scmp.eq.s32.totalorder %s16, 1
      %p65 = por %p63, %p64
      %p67 = scmp.ne.s32.totalorder %s50, %s66
      %p68 = scmp.eq.s32.totalorder %s16, 0
      %p69 = por %p67, %p68
      %p70 = scmp.le.s32.totalorder 1, %s10
      %p71 = scmp.lt.s32.totalorder %s10, 3
      %p72 = pnand %p70, %p71
      %p73 = pneg %p72
      // Predicated region
      $region9: #{tpu_custom_call.1} parent=5 // pred_check
        _
      $region10: #{tpu_custom_call.1} parent=5 // pred_check_branch
        %75 = sbr.rel (%p72) target = $region12
      $region11: #{tpu_custom_call.1} parent=5 // pred_region
        %s76 = ssub.s32 %s10, 1
      $region12: #{tpu_custom_call.1} parent=5 // pred_fallthru
        _
      %p77 = scmp.lt.s32.totalorder %s10, 2
      // Predicated region
      $region13: #{tpu_custom_call.1} parent=5 // pred_check
        %p78 = pneg %p77
      $region14: #{tpu_custom_call.1} parent=5 // pred_check_branch
        %80 = sbr.rel (%p78) target = $region16
      $region15: #{tpu_custom_call.1} parent=5 // pred_region
        // Predicated region
        $region17: #{tpu_custom_call.1} parent=15 // pred_check
          %p81 = pneg %p30
        $region18: #{tpu_custom_call.1} parent=15 // pred_check_branch
          %83 = sbr.rel (%p81) target = $region20
        $region19: #{tpu_custom_call.1} parent=15 // pred_region
          %p84 = scmp.lt.s32.totalorder %s10, 1
          %s85 = scalar_select %p84, %s10, 1
          %s86 = smul.addr %s85, 12
          %s87 = smul.addr %s86, 8
          %s88 = scalar_lea.vmem %s0, %s87
        $region20: #{tpu_custom_call.1} parent=15 // pred_fallthru
          _
      $region16: #{tpu_custom_call.1} parent=5 // pred_fallthru
        _
      %p89 = scmp.le.s32.totalorder 1, %s10
      %p90 = scmp.lt.s32.totalorder %s10, 3
      %p91 = pnand %p89, %p90
      %p92 = pneg %p91
      // Predicated region
      $region21: #{tpu_custom_call.1} parent=5 // pred_check
        _
      $region22: #{tpu_custom_call.1} parent=5 // pred_check_branch
        %94 = sbr.rel (%p91) target = $region24
      $region23: #{tpu_custom_call.1} parent=5 // pred_region
        %s95 = ssub.s32 %s10, 1
        %p96 = scmp.lt.s32.totalorder %s15, 1
        %s97 = scalar_select %p96, %s15, 1
        %s98 = smul.addr %s97, 12
        %s99 = smul.addr %s98, 8
        %s100 = scalar_lea.vmem %s0, %s99
        %p101 = pneg %p36
        %p102 = pneg %p33
        %p103 = pneg %p62
        %p104 = pneg %p59
        %s105 = sand.u32 %s49, 1
        %s106 = scalar_lea.sflag [#allocation3], %s105
        %s107 = sand.u32 %s49, 1
        %s108 = smul.addr %s107, 64
        %s109 = scalar_lea.vmem [#allocation2], %s108
        %p110 = scmp.lt.s32.totalorder %s15, 1
        %s111 = scalar_select %p110, %s15, 1
        %s112 = smul.addr %s111, 12
        %s113 = smul.addr %s112, 8
        %s114 = scalar_lea.vmem %s0, %s113
        %v115 = vld [vmem:[%s114] sm:$0xff]
        %v116 = vld [vmem:[%s114 + $0x8] sm:$0xff]
        %v117 = vld [vmem:[%s114 + $0x10] sm:$0xf]
        %v118 = vld [vmem:[%s114 + $0x18] sm:$0xff]
        %v119 = vld [vmem:[%s114 + $0x20] sm:$0xff]
        %v120 = vld [vmem:[%s114 + $0x28] sm:$0xf]
        %v121 = vld [vmem:[%s114 + $0x30] sm:$0xff]
        %v122 = vld [vmem:[%s114 + $0x38] sm:$0xff]
        %v123 = vld [vmem:[%s114 + $0x40] sm:$0xf]
        %v124 = vld [vmem:[%s114 + $0x48] sm:$0xff]
        %v125 = vld [vmem:[%s114 + $0x50] sm:$0xff]
        %v126 = vld [vmem:[%s114 + $0x58] sm:$0xf]
        %v127 = vtanh.pop %v115
        %v128 = vtanh.pop %v116
        %v129 = vtanh.pop %v117
        %v130 = vtanh.pop %v118
        %v131 = vtanh.pop %v119
        %v132 = vtanh.pop %v120
        %v133 = vtanh.pop %v121
        %v134 = vtanh.pop %v122
        %v135 = vtanh.pop %v123
        %v136 = vtanh.pop %v124
        %v137 = vtanh.pop %v125
        %v138 = vtanh.pop %v126
        %v139 = vadd.f32 %v127, 0.0
        %v140 = vadd.f32 %v128, 0.0
        %v141 = vadd.f32 %v130, 0.0
        %v142 = vadd.f32 %v131, 0.0
        %v143 = vadd.f32 %v133, 0.0
        %v144 = vadd.f32 %v134, 0.0
        %v145 = vadd.f32 %v136, 0.0
        %v146 = vadd.f32 %v137, 0.0
        %155 = vrot.lane.b32.xlu0 %v127, 127
        %v156 = vpop.permute.xlu0 %155
        %157 = vrot.lane.b32.xlu0 %v128, 127
        %v158 = vpop.permute.xlu0 %157
        %159 = vrot.lane.b32.xlu0 %v130, 127
        %v160 = vpop.permute.xlu0 %159
        %161 = vrot.lane.b32.xlu0 %v131, 127
        %v162 = vpop.permute.xlu0 %161
        %163 = vrot.lane.b32.xlu0 %v133, 127
        %v164 = vpop.permute.xlu0 %163
        %165 = vrot.lane.b32.xlu0 %v134, 127
        %v166 = vpop.permute.xlu0 %165
        %167 = vrot.lane.b32.xlu0 %v136, 127
        %v168 = vpop.permute.xlu0 %167
        %169 = vrot.lane.b32.xlu0 %v137, 127
        %v170 = vpop.permute.xlu0 %169
        %v179 = vadd.f32 %v139, %v156
        %v180 = vadd.f32 %v140, %v158
        %v181 = vadd.f32 %v141, %v160
        %v182 = vadd.f32 %v142, %v162
        %v183 = vadd.f32 %v143, %v164
        %v184 = vadd.f32 %v144, %v166
        %v185 = vadd.f32 %v145, %v168
        %v186 = vadd.f32 %v146, %v170
        %187 = vrot.lane.b32.xlu0 %v127, 126
        %v188 = vpop.permute.xlu0 %187
        %189 = vrot.lane.b32.xlu0 %v128, 126
        %v190 = vpop.permute.xlu0 %189
        %191 = vrot.lane.b32.xlu0 %v130, 126
        %v192 = vpop.permute.xlu0 %191
        %193 = vrot.lane.b32.xlu0 %v131, 126
        %v194 = vpop.permute.xlu0 %193
        %195 = vrot.lane.b32.xlu0 %v133, 126
        %v196 = vpop.permute.xlu0 %195
        %197 = vrot.lane.b32.xlu0 %v134, 126
        %v198 = vpop.permute.xlu0 %197
        %199 = vrot.lane.b32.xlu0 %v136, 126
        %v200 = vpop.permute.xlu0 %199
        %201 = vrot.lane.b32.xlu0 %v137, 126
        %v202 = vpop.permute.xlu0 %201
        %v211 = vadd.f32 %v179, %v188
        %v212 = vadd.f32 %v180, %v190
        %v213 = vadd.f32 %v181, %v192
        %v214 = vadd.f32 %v182, %v194
        %v215 = vadd.f32 %v183, %v196
        %v216 = vadd.f32 %v184, %v198
        %v217 = vadd.f32 %v185, %v200
        %v218 = vadd.f32 %v186, %v202
        %219 = vrot.lane.b32.xlu0 %v127, 125
        %v220 = vpop.permute.xlu0 %219
        %221 = vrot.lane.b32.xlu0 %v128, 125
        %v222 = vpop.permute.xlu0 %221
        %223 = vrot.lane.b32.xlu0 %v130, 125
        %v224 = vpop.permute.xlu0 %223
        %225 = vrot.lane.b32.xlu0 %v131, 125
        %v226 = vpop.permute.xlu0 %225
        %227 = vrot.lane.b32.xlu0 %v133, 125
        %v228 = vpop.permute.xlu0 %227
        %229 = vrot.lane.b32.xlu0 %v134, 125
        %v230 = vpop.permute.xlu0 %229
        %231 = vrot.lane.b32.xlu0 %v136, 125
        %v232 = vpop.permute.xlu0 %231
        %233 = vrot.lane.b32.xlu0 %v137, 125
        %v234 = vpop.permute.xlu0 %233
        %v243 = vadd.f32 %v211, %v220
        %v244 = vadd.f32 %v212, %v222
        %v245 = vadd.f32 %v213, %v224
        %v246 = vadd.f32 %v214, %v226
        %v247 = vadd.f32 %v215, %v228
        %v248 = vadd.f32 %v216, %v230
        %v249 = vadd.f32 %v217, %v232
        %v250 = vadd.f32 %v218, %v234
        %251 = vrot.lane.b32.xlu0 %v127, 124
        %v252 = vpop.permute.xlu0 %251
        %253 = vrot.lane.b32.xlu0 %v128, 124
        %v254 = vpop.permute.xlu0 %253
        %255 = vrot.lane.b32.xlu0 %v130, 124
        %v256 = vpop.permute.xlu0 %255
        %257 = vrot.lane.b32.xlu0 %v131, 124
        %v258 = vpop.permute.xlu0 %257
        %259 = vrot.lane.b32.xlu0 %v133, 124
        %v260 = vpop.permute.xlu0 %259
        %261 = vrot.lane.b32.xlu0 %v134, 124
        %v262 = vpop.permute.xlu0 %261
        %263 = vrot.lane.b32.xlu0 %v136, 124
        %v264 = vpop.permute.xlu0 %263
        %265 = vrot.lane.b32.xlu0 %v137, 124
        %v266 = vpop.permute.xlu0 %265
        %v275 = vadd.f32 %v243, %v252
        %v276 = vadd.f32 %v244, %v254
        %v277 = vadd.f32 %v245, %v256
        %v278 = vadd.f32 %v246, %v258
        %v279 = vadd.f32 %v247, %v260
        %v280 = vadd.f32 %v248, %v262
        %v281 = vadd.f32 %v249, %v264
        %v282 = vadd.f32 %v250, %v266
        %vm287 = vcmask 1046528
        %v288 = vrot.slane %v127, 1
        %v289 = vrot.slane %v128, 1
        %v290 = vsel %vm287, %v288, %v289
        %v291 = vrot.slane %v129, 1
        %v292 = vsel %vm287, %v289, %v291
        %v293 = vrot.slane %v130, 1
        %v294 = vrot.slane %v131, 1
        %v295 = vsel %vm287, %v293, %v294
        %v296 = vrot.slane %v132, 1
        %v297 = vsel %vm287, %v294, %v296
        %v298 = vrot.slane %v133, 1
        %v299 = vrot.slane %v134, 1
        %v300 = vsel %vm287, %v298, %v299
        %v301 = vrot.slane %v135, 1
        %v302 = vsel %vm287, %v299, %v301
        %v303 = vrot.slane %v136, 1
        %v304 = vrot.slane %v137, 1
        %v305 = vsel %vm287, %v303, %v304
        %v306 = vrot.slane %v138, 1
        %v307 = vsel %vm287, %v304, %v306
        %v316 = vadd.f32 %v275, %v290
        %v317 = vadd.f32 %v276, %v292
        %v318 = vadd.f32 %v277, %v295
        %v319 = vadd.f32 %v278, %v297
        %v320 = vadd.f32 %v279, %v300
        %v321 = vadd.f32 %v280, %v302
        %v322 = vadd.f32 %v281, %v305
        %v323 = vadd.f32 %v282, %v307
        %324 = vrot.lane.b32.xlu0 %v290, 127
        %v325 = vpop.permute.xlu0 %324
        %326 = vrot.lane.b32.xlu0 %v292, 127
        %v327 = vpop.permute.xlu0 %326
        %328 = vrot.lane.b32.xlu0 %v295, 127
        %v329 = vpop.permute.xlu0 %328
        %330 = vrot.lane.b32.xlu0 %v297, 127
        %v331 = vpop.permute.xlu0 %330
        %332 = vrot.lane.b32.xlu0 %v300, 127
        %v333 = vpop.permute.xlu0 %332
        %334 = vrot.lane.b32.xlu0 %v302, 127
        %v335 = vpop.permute.xlu0 %334
        %336 = vrot.lane.b32.xlu0 %v305, 127
        %v337 = vpop.permute.xlu0 %336
        %338 = vrot.lane.b32.xlu0 %v307, 127
        %v339 = vpop.permute.xlu0 %338
        %v348 = vadd.f32 %v316, %v325
        %v349 = vadd.f32 %v317, %v327
        %v350 = vadd.f32 %v318, %v329
        %v351 = vadd.f32 %v319, %v331
        %v352 = vadd.f32 %v320, %v333
        %v353 = vadd.f32 %v321, %v335
        %v354 = vadd.f32 %v322, %v337
        %v355 = vadd.f32 %v323, %v339
        %356 = vrot.lane.b32.xlu0 %v290, 126
        %v357 = vpop.permute.xlu0 %356
        %358 = vrot.lane.b32.xlu0 %v292, 126
        %v359 = vpop.permute.xlu0 %358
        %360 = vrot.lane.b32.xlu0 %v295, 126
        %v361 = vpop.permute.xlu0 %360
        %362 = vrot.lane.b32.xlu0 %v297, 126
        %v363 = vpop.permute.xlu0 %362
        %364 = vrot.lane.b32.xlu0 %v300, 126
        %v365 = vpop.permute.xlu0 %364
        %366 = vrot.lane.b32.xlu0 %v302, 126
        %v367 = vpop.permute.xlu0 %366
        %368 = vrot.lane.b32.xlu0 %v305, 126
        %v369 = vpop.permute.xlu0 %368
        %370 = vrot.lane.b32.xlu0 %v307, 126
        %v371 = vpop.permute.xlu0 %370
        %v380 = vadd.f32 %v348, %v357
        %v381 = vadd.f32 %v349, %v359
        %v382 = vadd.f32 %v350, %v361
        %v383 = vadd.f32 %v351, %v363
        %v384 = vadd.f32 %v352, %v365
        %v385 = vadd.f32 %v353, %v367
        %v386 = vadd.f32 %v354, %v369
        %v387 = vadd.f32 %v355, %v371
        %388 = vrot.lane.b32.xlu0 %v290, 125
        %v389 = vpop.permute.xlu0 %388
        %390 = vrot.lane.b32.xlu0 %v292, 125
        %v391 = vpop.permute.xlu0 %390
        %392 = vrot.lane.b32.xlu0 %v295, 125
        %v393 = vpop.permute.xlu0 %392
        %394 = vrot.lane.b32.xlu0 %v297, 125
        %v395 = vpop.permute.xlu0 %394
        %396 = vrot.lane.b32.xlu0 %v300, 125
        %v397 = vpop.permute.xlu0 %396
        %398 = vrot.lane.b32.xlu0 %v302, 125
        %v399 = vpop.permute.xlu0 %398
        %400 = vrot.lane.b32.xlu0 %v305, 125
        %v401 = vpop.permute.xlu0 %400
        %402 = vrot.lane.b32.xlu0 %v307, 125
        %v403 = vpop.permute.xlu0 %402
        %v412 = vadd.f32 %v380, %v389
        %v413 = vadd.f32 %v381, %v391
        %v414 = vadd.f32 %v382, %v393
        %v415 = vadd.f32 %v383, %v395
        %v416 = vadd.f32 %v384, %v397
        %v417 = vadd.f32 %v385, %v399
        %v418 = vadd.f32 %v386, %v401
        %v419 = vadd.f32 %v387, %v403
        %420 = vrot.lane.b32.xlu0 %v290, 124
        %v421 = vpop.permute.xlu0 %420
        %422 = vrot.lane.b32.xlu0 %v292, 124
        %v423 = vpop.permute.xlu0 %422
        %424 = vrot.lane.b32.xlu0 %v295, 124
        %v425 = vpop.permute.xlu0 %424
        %426 = vrot.lane.b32.xlu0 %v297, 124
        %v427 = vpop.permute.xlu0 %426
        %428 = vrot.lane.b32.xlu0 %v300, 124
        %v429 = vpop.permute.xlu0 %428
        %430 = vrot.lane.b32.xlu0 %v302, 124
        %v431 = vpop.permute.xlu0 %430
        %432 = vrot.lane.b32.xlu0 %v305, 124
        %v433 = vpop.permute.xlu0 %432
        %434 = vrot.lane.b32.xlu0 %v307, 124
        %v435 = vpop.permute.xlu0 %434
        %v444 = vadd.f32 %v412, %v421
        %v445 = vadd.f32 %v413, %v423
        %v446 = vadd.f32 %v414, %v425
        %v447 = vadd.f32 %v415, %v427
        %v448 = vadd.f32 %v416, %v429
        %v449 = vadd.f32 %v417, %v431
        %v450 = vadd.f32 %v418, %v433
        %v451 = vadd.f32 %v419, %v435
        %vm452 = vcmask 1045504
        %v453 = vrot.slane %v127, 2
        %v454 = vrot.slane %v128, 2
        %v455 = vsel %vm452, %v453, %v454
        %v456 = vrot.slane %v129, 2
        %v457 = vsel %vm452, %v454, %v456
        %v458 = vrot.slane %v130, 2
        %v459 = vrot.slane %v131, 2
        %v460 = vsel %vm452, %v458, %v459
        %v461 = vrot.slane %v132, 2
        %v462 = vsel %vm452, %v459, %v461
        %v463 = vrot.slane %v133, 2
        %v464 = vrot.slane %v134, 2
        %v465 = vsel %vm452, %v463, %v464
        %v466 = vrot.slane %v135, 2
        %v467 = vsel %vm452, %v464, %v466
        %v468 = vrot.slane %v136, 2
        %v469 = vrot.slane %v137, 2
        %v470 = vsel %vm452, %v468, %v469
        %v471 = vrot.slane %v138, 2
        %v472 = vsel %vm452, %v469, %v471
        %v481 = vadd.f32 %v444, %v455
        %v482 = vadd.f32 %v445, %v457
        %v483 = vadd.f32 %v446, %v460
        %v484 = vadd.f32 %v447, %v462
        %v485 = vadd.f32 %v448, %v465
        %v486 = vadd.f32 %v449, %v467
        %v487 = vadd.f32 %v450, %v470
        %v488 = vadd.f32 %v451, %v472
        %489 = vrot.lane.b32.xlu0 %v455, 127
        %v490 = vpop.permute.xlu0 %489
        %491 = vrot.lane.b32.xlu0 %v457, 127
        %v492 = vpop.permute.xlu0 %491
        %493 = vrot.lane.b32.xlu0 %v460, 127
        %v494 = vpop.permute.xlu0 %493
        %495 = vrot.lane.b32.xlu0 %v462, 127
        %v496 = vpop.permute.xlu0 %495
        %497 = vrot.lane.b32.xlu0 %v465, 127
        %v498 = vpop.permute.xlu0 %497
        %499 = vrot.lane.b32.xlu0 %v467, 127
        %v500 = vpop.permute.xlu0 %499
        %501 = vrot.lane.b32.xlu0 %v470, 127
        %v502 = vpop.permute.xlu0 %501
        %503 = vrot.lane.b32.xlu0 %v472, 127
        %v504 = vpop.permute.xlu0 %503
        %v513 = vadd.f32 %v481, %v490
        %v514 = vadd.f32 %v482, %v492
        %v515 = vadd.f32 %v483, %v494
        %v516 = vadd.f32 %v484, %v496
        %v517 = vadd.f32 %v485, %v498
        %v518 = vadd.f32 %v486, %v500
        %v519 = vadd.f32 %v487, %v502
        %v520 = vadd.f32 %v488, %v504
        %521 = vrot.lane.b32.xlu0 %v455, 126
        %v522 = vpop.permute.xlu0 %521
        %523 = vrot.lane.b32.xlu0 %v457, 126
        %v524 = vpop.permute.xlu0 %523
        %525 = vrot.lane.b32.xlu0 %v460, 126
        %v526 = vpop.permute.xlu0 %525
        %527 = vrot.lane.b32.xlu0 %v462, 126
        %v528 = vpop.permute.xlu0 %527
        %529 = vrot.lane.b32.xlu0 %v465, 126
        %v530 = vpop.permute.xlu0 %529
        %531 = vrot.lane.b32.xlu0 %v467, 126
        %v532 = vpop.permute.xlu0 %531
        %533 = vrot.lane.b32.xlu0 %v470, 126
        %v534 = vpop.permute.xlu0 %533
        %535 = vrot.lane.b32.xlu0 %v472, 126
        %v536 = vpop.permute.xlu0 %535
        %v545 = vadd.f32 %v513, %v522
        %v546 = vadd.f32 %v514, %v524
        %v547 = vadd.f32 %v515, %v526
        %v548 = vadd.f32 %v516, %v528
        %v549 = vadd.f32 %v517, %v530
        %v550 = vadd.f32 %v518, %v532
        %v551 = vadd.f32 %v519, %v534
        %v552 = vadd.f32 %v520, %v536
        %553 = vrot.lane.b32.xlu0 %v455, 125
        %v554 = vpop.permute.xlu0 %553
        %555 = vrot.lane.b32.xlu0 %v457, 125
        %v556 = vpop.permute.xlu0 %555
        %557 = vrot.lane.b32.xlu0 %v460, 125
        %v558 = vpop.permute.xlu0 %557
        %559 = vrot.lane.b32.xlu0 %v462, 125
        %v560 = vpop.permute.xlu0 %559
        %561 = vrot.lane.b32.xlu0 %v465, 125
        %v562 = vpop.permute.xlu0 %561
        %563 = vrot.lane.b32.xlu0 %v467, 125
        %v564 = vpop.permute.xlu0 %563
        %565 = vrot.lane.b32.xlu0 %v470, 125
        %v566 = vpop.permute.xlu0 %565
        %567 = vrot.lane.b32.xlu0 %v472, 125
        %v568 = vpop.permute.xlu0 %567
        %v577 = vadd.f32 %v545, %v554
        %v578 = vadd.f32 %v546, %v556
        %v579 = vadd.f32 %v547, %v558
        %v580 = vadd.f32 %v548, %v560
        %v581 = vadd.f32 %v549, %v562
        %v582 = vadd.f32 %v550, %v564
        %v583 = vadd.f32 %v551, %v566
        %v584 = vadd.f32 %v552, %v568
        %585 = vrot.lane.b32.xlu0 %v455, 124
        %v586 = vpop.permute.xlu0 %585
        %587 = vrot.lane.b32.xlu0 %v457, 124
        %v588 = vpop.permute.xlu0 %587
        %589 = vrot.lane.b32.xlu0 %v460, 124
        %v590 = vpop.permute.xlu0 %589
        %591 = vrot.lane.b32.xlu0 %v462, 124
        %v592 = vpop.permute.xlu0 %591
        %593 = vrot.lane.b32.xlu0 %v465, 124
        %v594 = vpop.permute.xlu0 %593
        %595 = vrot.lane.b32.xlu0 %v467, 124
        %v596 = vpop.permute.xlu0 %595
        %597 = vrot.lane.b32.xlu0 %v470, 124
        %v598 = vpop.permute.xlu0 %597
        %599 = vrot.lane.b32.xlu0 %v472, 124
        %v600 = vpop.permute.xlu0 %599
        %v609 = vadd.f32 %v577, %v586
        %v610 = vadd.f32 %v578, %v588
        %v611 = vadd.f32 %v579, %v590
        %v612 = vadd.f32 %v580, %v592
        %v613 = vadd.f32 %v581, %v594
        %v614 = vadd.f32 %v582, %v596
        %v615 = vadd.f32 %v583, %v598
        %v616 = vadd.f32 %v584, %v600
        %vm617 = vcmask 1044480
        %v618 = vrot.slane %v127, 3
        %v619 = vrot.slane %v128, 3
        %v620 = vsel %vm617, %v618, %v619
        %v621 = vrot.slane %v129, 3
        %v622 = vsel %vm617, %v619, %v621
        %v623 = vrot.slane %v130, 3
        %v624 = vrot.slane %v131, 3
        %v625 = vsel %vm617, %v623, %v624
        %v626 = vrot.slane %v132, 3
        %v627 = vsel %vm617, %v624, %v626
        %v628 = vrot.slane %v133, 3
        %v629 = vrot.slane %v134, 3
        %v630 = vsel %vm617, %v628, %v629
        %v631 = vrot.slane %v135, 3
        %v632 = vsel %vm617, %v629, %v631
        %v633 = vrot.slane %v136, 3
        %v634 = vrot.slane %v137, 3
        %v635 = vsel %vm617, %v633, %v634
        %v636 = vrot.slane %v138, 3
        %v637 = vsel %vm617, %v634, %v636
        %v646 = vadd.f32 %v609, %v620
        %v647 = vadd.f32 %v610, %v622
        %v648 = vadd.f32 %v611, %v625
        %v649 = vadd.f32 %v612, %v627
        %v650 = vadd.f32 %v613, %v630
        %v651 = vadd.f32 %v614, %v632
        %v652 = vadd.f32 %v615, %v635
        %v653 = vadd.f32 %v616, %v637
        %654 = vrot.lane.b32.xlu0 %v620, 127
        %v655 = vpop.permute.xlu0 %654
        %656 = vrot.lane.b32.xlu0 %v622, 127
        %v657 = vpop.permute.xlu0 %656
        %658 = vrot.lane.b32.xlu0 %v625, 127
        %v659 = vpop.permute.xlu0 %658
        %660 = vrot.lane.b32.xlu0 %v627, 127
        %v661 = vpop.permute.xlu0 %660
        %662 = vrot.lane.b32.xlu0 %v630, 127
        %v663 = vpop.permute.xlu0 %662
        %664 = vrot.lane.b32.xlu0 %v632, 127
        %v665 = vpop.permute.xlu0 %664
        %666 = vrot.lane.b32.xlu0 %v635, 127
        %v667 = vpop.permute.xlu0 %666
        %668 = vrot.lane.b32.xlu0 %v637, 127
        %v669 = vpop.permute.xlu0 %668
        %v678 = vadd.f32 %v646, %v655
        %v679 = vadd.f32 %v647, %v657
        %v680 = vadd.f32 %v648, %v659
        %v681 = vadd.f32 %v649, %v661
        %v682 = vadd.f32 %v650, %v663
        %v683 = vadd.f32 %v651, %v665
        %v684 = vadd.f32 %v652, %v667
        %v685 = vadd.f32 %v653, %v669
        %686 = vrot.lane.b32.xlu0 %v620, 126
        %v687 = vpop.permute.xlu0 %686
        %688 = vrot.lane.b32.xlu0 %v622, 126
        %v689 = vpop.permute.xlu0 %688
        %690 = vrot.lane.b32.xlu0 %v625, 126
        %v691 = vpop.permute.xlu0 %690
        %692 = vrot.lane.b32.xlu0 %v627, 126
        %v693 = vpop.permute.xlu0 %692
        %694 = vrot.lane.b32.xlu0 %v630, 126
        %v695 = vpop.permute.xlu0 %694
        %696 = vrot.lane.b32.xlu0 %v632, 126
        %v697 = vpop.permute.xlu0 %696
        %698 = vrot.lane.b32.xlu0 %v635, 126
        %v699 = vpop.permute.xlu0 %698
        %700 = vrot.lane.b32.xlu0 %v637, 126
        %v701 = vpop.permute.xlu0 %700
        %v710 = vadd.f32 %v678, %v687
        %v711 = vadd.f32 %v679, %v689
        %v712 = vadd.f32 %v680, %v691
        %v713 = vadd.f32 %v681, %v693
        %v714 = vadd.f32 %v682, %v695
        %v715 = vadd.f32 %v683, %v697
        %v716 = vadd.f32 %v684, %v699
        %v717 = vadd.f32 %v685, %v701
        %718 = vrot.lane.b32.xlu0 %v620, 125
        %v719 = vpop.permute.xlu0 %718
        %720 = vrot.lane.b32.xlu0 %v622, 125
        %v721 = vpop.permute.xlu0 %720
        %722 = vrot.lane.b32.xlu0 %v625, 125
        %v723 = vpop.permute.xlu0 %722
        %724 = vrot.lane.b32.xlu0 %v627, 125
        %v725 = vpop.permute.xlu0 %724
        %726 = vrot.lane.b32.xlu0 %v630, 125
        %v727 = vpop.permute.xlu0 %726
        %728 = vrot.lane.b32.xlu0 %v632, 125
        %v729 = vpop.permute.xlu0 %728
        %730 = vrot.lane.b32.xlu0 %v635, 125
        %v731 = vpop.permute.xlu0 %730
        %732 = vrot.lane.b32.xlu0 %v637, 125
        %v733 = vpop.permute.xlu0 %732
        %v742 = vadd.f32 %v710, %v719
        %v743 = vadd.f32 %v711, %v721
        %v744 = vadd.f32 %v712, %v723
        %v745 = vadd.f32 %v713, %v725
        %v746 = vadd.f32 %v714, %v727
        %v747 = vadd.f32 %v715, %v729
        %v748 = vadd.f32 %v716, %v731
        %v749 = vadd.f32 %v717, %v733
        %750 = vrot.lane.b32.xlu0 %v620, 124
        %v751 = vpop.permute.xlu0 %750
        %752 = vrot.lane.b32.xlu0 %v622, 124
        %v753 = vpop.permute.xlu0 %752
        %754 = vrot.lane.b32.xlu0 %v625, 124
        %v755 = vpop.permute.xlu0 %754
        %756 = vrot.lane.b32.xlu0 %v627, 124
        %v757 = vpop.permute.xlu0 %756
        %758 = vrot.lane.b32.xlu0 %v630, 124
        %v759 = vpop.permute.xlu0 %758
        %760 = vrot.lane.b32.xlu0 %v632, 124
        %v761 = vpop.permute.xlu0 %760
        %762 = vrot.lane.b32.xlu0 %v635, 124
        %v763 = vpop.permute.xlu0 %762
        %764 = vrot.lane.b32.xlu0 %v637, 124
        %v765 = vpop.permute.xlu0 %764
        %v774 = vadd.f32 %v742, %v751
        %v775 = vadd.f32 %v743, %v753
        %v776 = vadd.f32 %v744, %v755
        %v777 = vadd.f32 %v745, %v757
        %v778 = vadd.f32 %v746, %v759
        %v779 = vadd.f32 %v747, %v761
        %v780 = vadd.f32 %v748, %v763
        %v781 = vadd.f32 %v749, %v765
        %vm782 = vcmask 1043456
        %v783 = vrot.slane %v127, 4
        %v784 = vrot.slane %v128, 4
        %v785 = vsel %vm782, %v783, %v784
        %v786 = vrot.slane %v129, 4
        %v787 = vsel %vm782, %v784, %v786
        %v788 = vrot.slane %v130, 4
        %v789 = vrot.slane %v131, 4
        %v790 = vsel %vm782, %v788, %v789
        %v791 = vrot.slane %v132, 4
        %v792 = vsel %vm782, %v789, %v791
        %v793 = vrot.slane %v133, 4
        %v794 = vrot.slane %v134, 4
        %v795 = vsel %vm782, %v793, %v794
        %v796 = vrot.slane %v135, 4
        %v797 = vsel %vm782, %v794, %v796
        %v798 = vrot.slane %v136, 4
        %v799 = vrot.slane %v137, 4
        %v800 = vsel %vm782, %v798, %v799
        %v801 = vrot.slane %v138, 4
        %v802 = vsel %vm782, %v799, %v801
        %v811 = vadd.f32 %v774, %v785
        %v812 = vadd.f32 %v775, %v787
        %v813 = vadd.f32 %v776, %v790
        %v814 = vadd.f32 %v777, %v792
        %v815 = vadd.f32 %v778, %v795
        %v816 = vadd.f32 %v779, %v797
        %v817 = vadd.f32 %v780, %v800
        %v818 = vadd.f32 %v781, %v802
        %819 = vrot.lane.b32.xlu0 %v785, 127
        %v820 = vpop.permute.xlu0 %819
        %821 = vrot.lane.b32.xlu0 %v787, 127
        %v822 = vpop.permute.xlu0 %821
        %823 = vrot.lane.b32.xlu0 %v790, 127
        %v824 = vpop.permute.xlu0 %823
        %825 = vrot.lane.b32.xlu0 %v792, 127
        %v826 = vpop.permute.xlu0 %825
        %827 = vrot.lane.b32.xlu0 %v795, 127
        %v828 = vpop.permute.xlu0 %827
        %829 = vrot.lane.b32.xlu0 %v797, 127
        %v830 = vpop.permute.xlu0 %829
        %831 = vrot.lane.b32.xlu0 %v800, 127
        %v832 = vpop.permute.xlu0 %831
        %833 = vrot.lane.b32.xlu0 %v802, 127
        %v834 = vpop.permute.xlu0 %833
        %v843 = vadd.f32 %v811, %v820
        %v844 = vadd.f32 %v812, %v822
        %v845 = vadd.f32 %v813, %v824
        %v846 = vadd.f32 %v814, %v826
        %v847 = vadd.f32 %v815, %v828
        %v848 = vadd.f32 %v816, %v830
        %v849 = vadd.f32 %v817, %v832
        %v850 = vadd.f32 %v818, %v834
        %851 = vrot.lane.b32.xlu0 %v785, 126
        %v852 = vpop.permute.xlu0 %851
        %853 = vrot.lane.b32.xlu0 %v787, 126
        %v854 = vpop.permute.xlu0 %853
        %855 = vrot.lane.b32.xlu0 %v790, 126
        %v856 = vpop.permute.xlu0 %855
        %857 = vrot.lane.b32.xlu0 %v792, 126
        %v858 = vpop.permute.xlu0 %857
        %859 = vrot.lane.b32.xlu0 %v795, 126
        %v860 = vpop.permute.xlu0 %859
        %861 = vrot.lane.b32.xlu0 %v797, 126
        %v862 = vpop.permute.xlu0 %861
        %863 = vrot.lane.b32.xlu0 %v800, 126
        %v864 = vpop.permute.xlu0 %863
        %865 = vrot.lane.b32.xlu0 %v802, 126
        %v866 = vpop.permute.xlu0 %865
        %v875 = vadd.f32 %v843, %v852
        %v876 = vadd.f32 %v844, %v854
        %v877 = vadd.f32 %v845, %v856
        %v878 = vadd.f32 %v846, %v858
        %v879 = vadd.f32 %v847, %v860
        %v880 = vadd.f32 %v848, %v862
        %v881 = vadd.f32 %v849, %v864
        %v882 = vadd.f32 %v850, %v866
        %883 = vrot.lane.b32.xlu0 %v785, 125
        %v884 = vpop.permute.xlu0 %883
        %885 = vrot.lane.b32.xlu0 %v787, 125
        %v886 = vpop.permute.xlu0 %885
        %887 = vrot.lane.b32.xlu0 %v790, 125
        %v888 = vpop.permute.xlu0 %887
        %889 = vrot.lane.b32.xlu0 %v792, 125
        %v890 = vpop.permute.xlu0 %889
        %891 = vrot.lane.b32.xlu0 %v795, 125
        %v892 = vpop.permute.xlu0 %891
        %893 = vrot.lane.b32.xlu0 %v797, 125
        %v894 = vpop.permute.xlu0 %893
        %895 = vrot.lane.b32.xlu0 %v800, 125
        %v896 = vpop.permute.xlu0 %895
        %897 = vrot.lane.b32.xlu0 %v802, 125
        %v898 = vpop.permute.xlu0 %897
        %v907 = vadd.f32 %v875, %v884
        %v908 = vadd.f32 %v876, %v886
        %v909 = vadd.f32 %v877, %v888
        %v910 = vadd.f32 %v878, %v890
        %v911 = vadd.f32 %v879, %v892
        %v912 = vadd.f32 %v880, %v894
        %v913 = vadd.f32 %v881, %v896
        %v914 = vadd.f32 %v882, %v898
        %915 = vrot.lane.b32.xlu0 %v785, 124
        %v916 = vpop.permute.xlu0 %915
        %917 = vrot.lane.b32.xlu0 %v787, 124
        %v918 = vpop.permute.xlu0 %917
        %919 = vrot.lane.b32.xlu0 %v790, 124
        %v920 = vpop.permute.xlu0 %919
        %921 = vrot.lane.b32.xlu0 %v792, 124
        %v922 = vpop.permute.xlu0 %921
        %923 = vrot.lane.b32.xlu0 %v795, 124
        %v924 = vpop.permute.xlu0 %923
        %925 = vrot.lane.b32.xlu0 %v797, 124
        %v926 = vpop.permute.xlu0 %925
        %927 = vrot.lane.b32.xlu0 %v800, 124
        %v928 = vpop.permute.xlu0 %927
        %929 = vrot.lane.b32.xlu0 %v802, 124
        %v930 = vpop.permute.xlu0 %929
        %v939 = vadd.f32 %v907, %v916
        %v940 = vadd.f32 %v908, %v918
        %v941 = vadd.f32 %v909, %v920
        %v942 = vadd.f32 %v910, %v922
        %v943 = vadd.f32 %v911, %v924
        %v944 = vadd.f32 %v912, %v926
        %v945 = vadd.f32 %v913, %v928
        %v946 = vadd.f32 %v914, %v930
        %v947 = vmul.f32 %v939, 0.04
        %v948 = vmul.f32 %v940, 0.04
        %v949 = vmul.f32 %v941, 0.04
        %v950 = vmul.f32 %v942, 0.04
        %v951 = vmul.f32 %v943, 0.04
        %v952 = vmul.f32 %v944, 0.04
        %v953 = vmul.f32 %v945, 0.04
        %v954 = vmul.f32 %v946, 0.04
        %v955 = vlaneseq
        %v956 = vshrl.u32 %v955, 7
        %v957 = vadd.s32 %v956, 8
        %v958 = vlaneseq
        %v959 = vand.u32 %v958, 127
        %vm960 = vcmp.lt.s32.totalorder %v956, 4
        %vm961 = vcmp.lt.s32.totalorder %v957, 4
        %vm962 = vcmp.lt.s32.totalorder %v959, 16
        %vm963 = vmand %vm960, %vm962
        %vm964 = vmand %vm961, %vm962
        %v965 = vsel %vm963, %v947, 0.0
        %v966 = vsel %vm964, %v948, 0.0
        %v967 = vsel %vm963, %v949, 0.0
        %v968 = vsel %vm964, %v950, 0.0
        %v969 = vsel %vm963, %v951, 0.0
        %v970 = vsel %vm964, %v952, 0.0
        %v971 = vsel %vm963, %v953, 0.0
        %v972 = vsel %vm964, %v954, 0.0
        %vm973 = vcmask 130048
        %974 = vst.msk [vmem:[%s109] sm:$0xff] %vm973, %v965
        %975 = vst.msk [vmem:[%s109 + $0x8] sm:$0xff] %vm973, %v966
        %976 = vst.msk [vmem:[%s109 + $0x10] sm:$0xff] %vm973, %v967
        %977 = vst.msk [vmem:[%s109 + $0x18] sm:$0xff] %vm973, %v968
        %978 = vst.msk [vmem:[%s109 + $0x20] sm:$0xff] %vm973, %v969
        %979 = vst.msk [vmem:[%s109 + $0x28] sm:$0xff] %vm973, %v970
        %980 = vst.msk [vmem:[%s109 + $0x30] sm:$0xff] %vm973, %v971
        %981 = vst.msk [vmem:[%s109 + $0x38] sm:$0xff] %vm973, %v972
        %s982 = sand.u32 %s49, 1
        %s983 = scalar_lea.sflag [#allocation3], %s982
        %s984 = sand.u32 %s49, 1
        %s985 = smul.addr %s984, 64
        %s986 = scalar_lea.vmem [#allocation2], %s985
        // Predicated region
        $region25: #{tpu_custom_call.1} parent=23 // pred_check
          %p987 = pneg %p59
        $region26: #{tpu_custom_call.1} parent=23 // pred_check_branch
          %989 = sbr.rel (%p987) target = $region28
        $region27: #{tpu_custom_call.1} parent=23 // pred_region
          %s991 = ssub.s32 1024, 1024
          %992 = vsyncadd %s983, %s991
          %s993 = smul.addr %s15, 8
          %s994 = smul.addr %s993, 128
          %s995 = scalar_lea.hbm %s1, %s994
          %s996 = sshll.u32 %s986, 4
          %s997 = int_to_ptr.vmem [resolvable:$true] %s996
          %1002 = dma.vmem_to_hbm [thread:$0]  %s997, 1024, %s995, %s983, 128, 128, 8
        $region28: #{tpu_custom_call.1} parent=23 // pred_fallthru
          _
      $region24: #{tpu_custom_call.1} parent=5 // pred_fallthru
        _
      %p1003 = scmp.le.s32.totalorder 2, %s10
      // Predicated region
      $region29: #{tpu_custom_call.1} parent=5 // pred_check
        %p1004 = pneg %p1003
      $region30: #{tpu_custom_call.1} parent=5 // pred_check_branch
        %1006 = sbr.rel (%p1004) target = $region32
      $region31: #{tpu_custom_call.1} parent=5 // pred_region
        %s1007 = ssub.s32 %s10, 2
        // Predicated region
        $region33: #{tpu_custom_call.1} parent=31 // pred_check
          %p1008 = pneg %p65
        $region34: #{tpu_custom_call.1} parent=31 // pred_check_branch
          %1010 = sbr.rel (%p1008) target = $region36
        $region35: #{tpu_custom_call.1} parent=31 // pred_region
          %s1011 = sand.u32 %s50, 1
          %s1012 = scalar_lea.sflag [#allocation3], %s1011
          %s1013 = sand.u32 %s50, 1
          %s1014 = smul.addr %s1013, 64
          %s1015 = scalar_lea.vmem [#allocation2], %s1014
          %1016 = dma.done %s1012, 1024
        $region36: #{tpu_custom_call.1} parent=31 // pred_fallthru
          _
      $region32: #{tpu_custom_call.1} parent=5 // pred_fallthru
        _
    $region6: #{tpu_custom_call.1} parent=1 // loop_footer
      %s14 = sadd.s32 1, %s10
    $region7: #{tpu_custom_call.1} parent=1 // loop_footer_branch
      %9 = sbr.rel target = $region3
    $region8: #{tpu_custom_call.1} parent=1 // loop_exit
      _
    %1017 = vsyncpa [#allocation3], 1
    %s1018 = scalar_lea.sflag [#allocation3], 1
    %1019 = vsyncpa %s1018, 1

</llo_original>
